<compile_context>
chip_gen: v7x
topology: tpu7x:2x2x1
jax: 0.10.0
libtpu: 0.0.40
codegen_flags: <defaults>
</compile_context>

<pallas_src>
from functools import partial

import jax
import jax.numpy as jnp
from jax.experimental import pallas as pl
from jax.experimental.pallas import tpu as pltpu


def _conv1d_kernel(*refs, K, dilation, stride, T_blk, has_halo):
    # refs (has_halo): x_a (1,C_in_p,T_in_blk), x_b (1,C_in_p,H_blk),
    #                  w (K,C_out_p,C_in_p), b (C_out_p,1), o (1,C_out_p,T_blk)
    if has_halo:
        x_a_ref, x_b_ref, w_ref, b_ref, o_ref = refs
    else:
        x_a_ref, w_ref, b_ref, o_ref = refs

    x_win = x_a_ref[0]                                    # (C_in_p, T_in_blk)
    if has_halo:
        # Single small lane-concat for the halo (<= H_blk columns).  The K-tap im2col
        # concat of the previous revision is gone entirely.
        x_win = jnp.concatenate([x_win, x_b_ref[0]], axis=-1)

    acc = None
    for k in range(K):                                    # static unroll over taps
        start = k * dilation
        if stride == 1:
            tap = x_win[:, start:start + T_blk]
        else:
            # TODO(synk): de-interleave x_win into stride phase planes once per tile
            # instead of K strided lane slices (each is an XLU gather).
            tap = x_win[:, start:start + (T_blk - 1) * stride + 1:stride]
        p = jnp.dot(w_ref[k], tap, preferred_element_type=jnp.float32)
        acc = p if acc is None else acc + p               # v7x: in-place MRB accumulation
    acc = acc + b_ref[...]                                # (C_out_p,1) lane-broadcast add
    o_ref[0, :, :] = acc.astype(o_ref.dtype)


def conv_norm_forward(x, weight, bias=None, *, stride=1, padding=None, dilation=1,
                      t_block=512, use_bf16_matmul=False):
    """x: (N, C_in, T); weight: (C_out, C_in, K); bias: (C_out,) -> (N, C_out, T_out)."""
    N, C_in, T = x.shape
    C_out, C_in_w, K = weight.shape
    assert C_in == C_in_w, "weight C_in mismatch"
    assert stride >= 1 and dilation >= 1
    if padding is None:
        assert K % 2 == 1, "Kernel size must be odd if padding is not specified"
        padding = dilation * (K - 1) // 2
    if bias is None:
        bias = jnp.zeros((C_out,), jnp.float32)

    out_dtype = x.dtype
    compute_dtype = jnp.bfloat16 if use_bf16_matmul else x.dtype

    # nn.Conv1d output length.
    T_out = (T + 2 * padding - dilation * (K - 1) - 1) // stride + 1
    assert T_out > 0

    def _round_up(a, m):
        return (a + m - 1) // m * m

    # ---- time-tile geometry (lane-dense, T_blk a multiple of 128) ----
    T_blk = min(_round_up(max(t_block, 128), 128), _round_up(T_out, 128))
    if N == 1 and T_out > 128:
        # Keep at least 2 grid steps so both v7x TensorCores get work.
        T_blk = min(T_blk, max(128, _round_up(-(-T_out // 2), 128)))

    halo = max(0, dilation * (K - 1) + 1 - stride)        # extra input cols past the block
    has_halo = halo > 0
    if has_halo:
        H_blk = _round_up(halo, 128)
        if H_blk > 128:
            # Rare (halo > 128): grow T_blk so the halo block always tiles T_in_blk.
            T_blk = _round_up(max(T_blk, H_blk), H_blk)
    else:
        H_blk = 0

    T_in_blk = T_blk * stride                             # input cols owned by one tile
    halo_ratio = (T_in_blk // H_blk) if has_halo else 0
    num_t = -(-T_out // T_blk)
    T_out_padded = num_t * T_blk

    # ---- channel padding to sublane multiples ----
    sub = 16 if compute_dtype == jnp.bfloat16 else 8
    C_in_p = _round_up(C_in, sub)
    C_out_p = _round_up(C_out, sub)

    # ---- pad x once: channels -> C_in_p, time -> [left conv pad | x | zeros] ----
    # TODO(synk): fold the zero padding into the kernel (mask first/last time tile) to
    # avoid this wrapper-side HBM round trip of x.
    T_total = max(T + 2 * padding, num_t * T_in_blk + H_blk)
    x_p = jnp.pad(x.astype(compute_dtype),
                  ((0, 0), (0, C_in_p - C_in), (padding, T_total - padding - T)))

    # ---- weight as (K, C_out_p, C_in_p): one resident plane per tap ----
    w_p = jnp.pad(weight, ((0, C_out_p - C_out), (0, C_in_p - C_in), (0, 0)))
    w3 = jnp.transpose(w_p, (2, 0, 1)).astype(compute_dtype)

    # ---- bias as (C_out_p, 1): pure VPU lane-broadcast add ----
    b2 = jnp.pad(bias.astype(jnp.float32), (0, C_out_p - C_out)).reshape(C_out_p, 1)

    kernel = partial(_conv1d_kernel, K=K, dilation=dilation, stride=stride,
                     T_blk=T_blk, has_halo=has_halo)

    in_specs = [pl.BlockSpec((1, C_in_p, T_in_blk), lambda n, t: (n, 0, t))]
    inputs = [x_p]
    if has_halo:
        # Same array, second (small) view: the 128-lane block right after x_a.
        in_specs.append(pl.BlockSpec((1, C_in_p, H_blk),
                                     lambda n, t: (n, 0, (t + 1) * halo_ratio)))
        inputs.append(x_p)
    in_specs += [
        pl.BlockSpec((K, C_out_p, C_in_p), lambda n, t: (0, 0, 0),
                     pipeline_mode=pl.Buffered(1)),        # resident weight, single buffer
        pl.BlockSpec((C_out_p, 1), lambda n, t: (0, 0),
                     pipeline_mode=pl.Buffered(1)),        # resident bias, single buffer
    ]
    inputs += [w3, b2]

    # ---- explicit VMEM budget: blocks + in-kernel temporaries, +50% headroom ----
    in_isz = jnp.dtype(compute_dtype).itemsize
    out_isz = jnp.dtype(out_dtype).itemsize
    vmem_needed = (
        2 * C_in_p * T_in_blk * in_isz                         # x_a (double-buffered)
        + (2 * C_in_p * H_blk * in_isz if has_halo else 0)     # halo view
        + K * C_out_p * C_in_p * in_isz                        # weight (single buffer)
        + C_out_p * 128 * 4                                    # bias (lane-padded)
        + 2 * C_out_p * T_blk * out_isz                        # output (double-buffered)
        + C_in_p * (T_in_blk + H_blk) * in_isz                 # x_win temp
        + 2 * C_in_p * max(T_blk, 128) * in_isz                # tap temporaries
        + 2 * C_out_p * T_blk * 4                              # f32 acc + dot result
    )
    vmem_limit = int(min(max(vmem_needed * 3 // 2 + (2 << 20), 16 << 20), 64 << 20))

    x_read_cols = num_t * (T_in_blk + H_blk)                   # includes halo re-reads
    cost = pl.CostEstimate(
        flops=2 * N * C_out_p * C_in_p * K * T_out_padded,
        transcendentals=0,
        bytes_accessed=(N * C_in_p * x_read_cols * in_isz
                        + w3.size * in_isz + b2.size * 4
                        + N * C_out_p * T_out_padded * out_isz),
    )

    out = pl.pallas_call(
        kernel,
        out_shape=jax.ShapeDtypeStruct((N, C_out_p, T_out_padded), out_dtype),
        grid_spec=pltpu.PrefetchScalarGridSpec(
            num_scalar_prefetch=0,
            grid=(N, num_t),
            in_specs=in_specs,
            out_specs=pl.BlockSpec((1, C_out_p, T_blk), lambda n, t: (n, 0, t)),
        ),
        compiler_params=pltpu.CompilerParams(
            dimension_semantics=("parallel", "parallel"),
            vmem_limit_bytes=vmem_limit),
        cost_estimate=cost,
    )(*inputs)

    # Trim only if padding was actually added.
    if C_out_p != C_out or T_out_padded != T_out:
        out = out[:, :C_out, :T_out]
    return out


def init_conv_norm_params(key, in_channels, out_channels, kernel_size, w_init_gain="linear"):
    """Deterministic params matching nn.Conv1d + xavier_uniform_(gain=calculate_gain(gain))."""
    kw, kb = jax.random.split(key)
    gain = 1.0  # calculate_gain('linear') == 1.0
    fan_in = in_channels * kernel_size
    fan_out = out_channels * kernel_size
    w_bound = gain * (6.0 / (fan_in + fan_out)) ** 0.5
    weight = jax.random.uniform(
        kw, (out_channels, in_channels, kernel_size), jnp.float32, -w_bound, w_bound)
    # PyTorch Conv1d default bias init: U(-1/sqrt(fan_in), 1/sqrt(fan_in))
    b_bound = 1.0 / (fan_in ** 0.5)
    bias = jax.random.uniform(kb, (out_channels,), jnp.float32, -b_bound, b_bound)
    return weight, bias


def _reference(x, w, b, stride, padding, dilation):
    return jax.lax.conv_general_dilated(
        x, w, window_strides=(stride,), padding=[(padding, padding)],
        rhs_dilation=(dilation,), dimension_numbers=("NCH", "OIH", "NCH"),
    ) + b[None, :, None]


if __name__ == "__main__":
    key = jax.random.PRNGKey(0)

    def run_case(k, *, N, C_in, C_out, T, K, stride=1, dilation=1, t_block=512,
                 use_bf16=False, atol=1e-4, rtol=1e-4):
        k_x, k_p = jax.random.split(k)
        x = jax.random.normal(k_x, (N, C_in, T), jnp.float32)
        w, b = init_conv_norm_params(k_p, C_in, C_out, K)
        out = conv_norm_forward(x, w, b, stride=stride, padding=None, dilation=dilation,
                                t_block=t_block, use_bf16_matmul=use_bf16)
        out = jax.block_until_ready(out)
        pad = dilation * (K - 1) // 2
        ref = _reference(x, w, b, stride, pad, dilation)
        assert out.shape == ref.shape, (out.shape, ref.shape)
        err = float(jnp.max(jnp.abs(out - ref)))
        assert jnp.allclose(out, ref, atol=atol, rtol=rtol), err

    keys = jax.random.split(key, 6)
    # 1) ConvNorm default at small shapes: K=3, stride=1, dilation=1 (f32 path).
    run_case(keys[0], N=2, C_in=4, C_out=6, T=16, K=3)
    # 2) Multi-tile time grid at the default 512-lane tile: K=5, dilation=2.
    run_case(keys[1], N=2, C_in=8, C_out=16, T=1200, K=5, dilation=2)
    # 3) Small (128-lane) tiles with the halo crossing every tile boundary.
    run_case(keys[2], N=2, C_in=8, C_out=16, T=300, K=5, dilation=2, t_block=128)
    # 4) Pointwise conv (K=1, no-halo path).
    run_case(keys[3], N=2, C_in=4, C_out=8, T=16, K=1)
    # 5) Single batch: exercises the >=2 time-tile cap (keeps both v7x TCs busy).
    run_case(keys[4], N=1, C_in=8, C_out=8, T=600, K=3)
    # 6) bf16 MXU inputs with f32 accumulation.
    run_case(keys[5], N=2, C_in=4, C_out=6, T=16, K=3, use_bf16=True, atol=5e-2, rtol=5e-2)

    print("KERNEL_OK")
</pallas_src>

<mosaic_0001>
module attributes {stable_mosaic.version = 11 : i64} {
  func.func @_conv1d_kernel(%arg0: i32, %arg1: i32, %arg2: memref<1x8x128xf32, #tpu.memory_space<vmem>>, %arg3: memref<1x8x128xf32, #tpu.memory_space<vmem>>, %arg4: memref<3x8x8xf32, #tpu.memory_space<vmem>>, %arg5: memref<8x1xf32, #tpu.memory_space<vmem>>, %arg6: memref<1x8x128xf32, #tpu.memory_space<vmem>>) attributes {dimension_semantics = [#tpu.dimension_semantics<parallel>, #tpu.dimension_semantics<parallel>], iteration_bounds = array<i64: 2, 1>, scalar_prefetch = 0 : i64, scratch_operands = 0 : i64, tpu.core_type = #tpu.core_type<tc>, window_params = [{transform_indices = @transform_0, window_bounds = array<i64: 1, 8, 128>}, {transform_indices = @transform_1, window_bounds = array<i64: 1, 8, 128>}, {pipeline_mode = #tpu.pipeline_mode<synchronous>, transform_indices = @transform_2, window_bounds = array<i64: 3, 8, 8>}, {pipeline_mode = #tpu.pipeline_mode<synchronous>, transform_indices = @transform_3, window_bounds = array<i64: 8, 1>}, {transform_indices = @transform_4, window_bounds = array<i64: 1, 8, 128>}]} {
    %c0 = arith.constant 0 : index
    %c0_0 = arith.constant 0 : index
    %c0_1 = arith.constant 0 : index
    %0 = vector.load %arg2[%c0, %c0_0, %c0_1] : memref<1x8x128xf32, #tpu.memory_space<vmem>>, vector<1x8x128xf32>
    %1 = vector.shape_cast %0 : vector<1x8x128xf32> to vector<8x128xf32>
    %c0_2 = arith.constant 0 : index
    %c0_3 = arith.constant 0 : index
    %c0_4 = arith.constant 0 : index
    %2 = vector.load %arg3[%c0_2, %c0_3, %c0_4] : memref<1x8x128xf32, #tpu.memory_space<vmem>>, vector<1x8x128xf32>
    %3 = vector.shape_cast %2 : vector<1x8x128xf32> to vector<8x128xf32>
    %4 = tpu.concatenate %1, %3 in 1 : vector<8x128xf32>, vector<8x128xf32> -> vector<8x256xf32>
    %5 = vector.extract_strided_slice %4 {offsets = [0, 0], sizes = [8, 128], strides = [1, 1]} : vector<8x256xf32> to vector<8x128xf32>
    %c0_5 = arith.constant 0 : index
    %c0_6 = arith.constant 0 : index
    %c0_7 = arith.constant 0 : index
    %6 = vector.load %arg4[%c0_5, %c0_6, %c0_7] : memref<3x8x8xf32, #tpu.memory_space<vmem>>, vector<1x8x8xf32>
    %7 = vector.shape_cast %6 : vector<1x8x8xf32> to vector<8x8xf32>
    %cst = arith.constant dense<0.000000e+00> : vector<8x128xf32>
    %8 = tpu.matmul %7, %5, %cst {dimension_numbers = #tpu.dot_dimension_numbers<[1], [0], [0], [1], [0, 0, 1, 1], [], []>} : vector<8x8xf32>, vector<8x128xf32>, vector<8x128xf32> -> vector<8x128xf32>
    %9 = vector.extract_strided_slice %4 {offsets = [0, 1], sizes = [8, 128], strides = [1, 1]} : vector<8x256xf32> to vector<8x128xf32>
    %c1 = arith.constant 1 : index
    %c0_8 = arith.constant 0 : index
    %c0_9 = arith.constant 0 : index
    %10 = vector.load %arg4[%c1, %c0_8, %c0_9] : memref<3x8x8xf32, #tpu.memory_space<vmem>>, vector<1x8x8xf32>
    %11 = vector.shape_cast %10 : vector<1x8x8xf32> to vector<8x8xf32>
    %cst_10 = arith.constant dense<0.000000e+00> : vector<8x128xf32>
    %12 = tpu.matmul %11, %9, %cst_10 {dimension_numbers = #tpu.dot_dimension_numbers<[1], [0], [0], [1], [0, 0, 1, 1], [], []>} : vector<8x8xf32>, vector<8x128xf32>, vector<8x128xf32> -> vector<8x128xf32>
    %13 = arith.addf %8, %12 : vector<8x128xf32>
    %14 = vector.extract_strided_slice %4 {offsets = [0, 2], sizes = [8, 128], strides = [1, 1]} : vector<8x256xf32> to vector<8x128xf32>
    %c2 = arith.constant 2 : index
    %c0_11 = arith.constant 0 : index
    %c0_12 = arith.constant 0 : index
    %15 = vector.load %arg4[%c2, %c0_11, %c0_12] : memref<3x8x8xf32, #tpu.memory_space<vmem>>, vector<1x8x8xf32>
    %16 = vector.shape_cast %15 : vector<1x8x8xf32> to vector<8x8xf32>
    %cst_13 = arith.constant dense<0.000000e+00> : vector<8x128xf32>
    %17 = tpu.matmul %16, %14, %cst_13 {dimension_numbers = #tpu.dot_dimension_numbers<[1], [0], [0], [1], [0, 0, 1, 1], [], []>} : vector<8x8xf32>, vector<8x128xf32>, vector<8x128xf32> -> vector<8x128xf32>
    %18 = arith.addf %13, %17 : vector<8x128xf32>
    %c0_14 = arith.constant 0 : index
    %c0_15 = arith.constant 0 : index
    %19 = vector.load %arg5[%c0_14, %c0_15] : memref<8x1xf32, #tpu.memory_space<vmem>>, vector<8x1xf32>
    %20 = vector.broadcast %19 : vector<8x1xf32> to vector<8x128xf32>
    %21 = arith.addf %18, %20 : vector<8x128xf32>
    %c0_16 = arith.constant 0 : index
    %c0_17 = arith.constant 0 : index
    %c0_18 = arith.constant 0 : index
    %22 = vector.load %arg6[%c0_16, %c0_17, %c0_18] : memref<1x8x128xf32, #tpu.memory_space<vmem>>, vector<1x8x128xf32>
    %23 = vector.shape_cast %22 : vector<1x8x128xf32> to vector<8x128xf32>
    %24 = vector.shape_cast %21 : vector<8x128xf32> to vector<1x8x128xf32>
    tpu.vector_store %arg6[%c0_16, %c0_17, %c0_18], %24 {strides = array<i32>} : memref<1x8x128xf32, #tpu.memory_space<vmem>>, vector<1x8x128xf32>,
    return
  }
  func.func @transform_0(%arg0: i32, %arg1: i32) -> (i32, i32, i32) {
    %c0_i32 = arith.constant 0 : i32
    %c0_i32_0 = arith.constant 0 : i32
    return %arg0, %c0_i32, %arg1 : i32, i32, i32
  }
  func.func @transform_1(%arg0: i32, %arg1: i32) -> (i32, i32, i32) {
    %c1_i32 = arith.constant 1 : i32
    %0 = arith.addi %arg1, %c1_i32 : i32
    %c1_i32_0 = arith.constant 1 : i32
    %1 = arith.muli %0, %c1_i32_0 : i32
    %c0_i32 = arith.constant 0 : i32
    %c0_i32_1 = arith.constant 0 : i32
    return %arg0, %c0_i32, %1 : i32, i32, i32
  }
  func.func @transform_2(%arg0: i32, %arg1: i32) -> (i32, i32, i32) {
    %c0_i32 = arith.constant 0 : i32
    %c0_i32_0 = arith.constant 0 : i32
    %c0_i32_1 = arith.constant 0 : i32
    %c0_i32_2 = arith.constant 0 : i32
    return %c0_i32, %c0_i32_0, %c0_i32_1 : i32, i32, i32
  }
  func.func @transform_3(%arg0: i32, %arg1: i32) -> (i32, i32) {
    %c0_i32 = arith.constant 0 : i32
    %c0_i32_0 = arith.constant 0 : i32
    %c0_i32_1 = arith.constant 0 : i32
    return %c0_i32, %c0_i32_0 : i32, i32
  }
  func.func @transform_4(%arg0: i32, %arg1: i32) -> (i32, i32, i32) {
    %c0_i32 = arith.constant 0 : i32
    %c0_i32_0 = arith.constant 0 : i32
    return %arg0, %c0_i32, %arg1 : i32, i32, i32
  }
}

</mosaic_0001>

<llo_original>
// kernel: tpu_custom_call.1
$region0: #{tpu_custom_call.1}
  #allocation0 [shape = 'u32[]', space=smem, size = 0x4, offset = 0x4, fixed_abs, tag = 'smem constant byte address 0x4 - core index']
  #allocation1 [shape = 'u32[144,128]{1,0:T(1,128)}', space=vmem, size = 0x12000, scoped, tag = 'internal scratch']
  %s0 = inlined_call_operand.hbm [shape: f32[2,8,256], index: 0, kind: input, shape index: {}]
  %s1 = inlined_call_operand.hbm [shape: f32[2,8,256], index: 1, kind: input, shape index: {}]
  %s2 = inlined_call_operand.hbm [shape: f32[3,8,8], index: 2, kind: input, shape index: {}]
  %s3 = inlined_call_operand.vmem [shape: f32[8,1], index: 3, kind: input, shape index: {}]
  %s4 = inlined_call_operand.hbm [shape: f32[2,8,128], index: 4, kind: output, shape index: {}]
  %s5 = sld [smem:[#allocation0]]
  $region61: #{tpu_custom_call.1} parent=0
    _
  %s7 = ssub.s32 1, %s5
  %s8 = scalar_select 0, %s7, %s5
  $region1: #{tpu_custom_call.1} parent=0
    #allocation2 [shape = 'u8[8192]{0}', space=vmem, size = 0x2000, scoped, tag = 'input window, operand 0']
    #allocation3 [shape = 's32[2]{0}', space=sflag, size = 0x8, scoped, tag = 'scoped memory for tpu_custom_call.1']
    #allocation4 [shape = 's32[2]{0}', space=sflag, size = 0x8, scoped, tag = 'scoped memory for tpu_custom_call.1']
    #allocation5 [shape = 'u8[8192]{0}', space=vmem, size = 0x2000, scoped, tag = 'input window, operand 1']
    #allocation6 [shape = 's32[2]{0}', space=sflag, size = 0x8, scoped, tag = 'scoped memory for tpu_custom_call.1']
    #allocation7 [shape = 'u8[12288]{0}', space=vmem, size = 0x3000, scoped, tag = 'input window, operand 2, single buffered']
    #allocation8 [shape = 'u8[8192]{0}', space=vmem, size = 0x2000, scoped, tag = 'output window, operand 0']
    %9 = vsyncpa [#allocation3], 0
    %s10 = scalar_lea.sflag [#allocation3], 1
    %11 = vsyncpa %s10, 0
    %12 = vsyncpa [#allocation6], 0
    %s13 = scalar_lea.sflag [#allocation6], 1
    %14 = vsyncpa %s13, 0
    %15 = vsyncpa [#allocation4], 0
    %s16 = scalar_lea.sflag [#allocation4], 1
    %17 = vsyncpa %s16, 0
    loop: start=0, step=1, limit=4
    $region2: #{tpu_custom_call.1} parent=1 // loop_pre_header
      _
    $region3: #{tpu_custom_call.1} parent=1 // loop_header
      %s19 = sphi 0, %s23
      %p20 = scmp.ge.s32.totalorder %s19, 4
      %s26 = sphi 0, %s38
      %s27 = sphi 0, %s34
      %s28 = sphi 0, %s26
      %s29 = sphi 0, %s27
      %s30 = sphi 0, %s28
      %s31 = sphi 0, %s29
      %s43 = sphi 0, %s45
      %s46 = sphi 0, %s43
      %s47 = sphi 0, %s46
      %s63 = sphi 0, %s47
      %s73 = sphi 0, %s75
      %s76 = sphi 0, %s73
      %s77 = sphi 0, %s76
      %s93 = sphi 0, %s77
      %s97 = sphi 0, %s97
      %s99 = sphi 0, %s97
      %s100 = sphi 0, %s99
      %s114 = sphi 0, %s100
      %s118 = sphi 0, %s118
      %s120 = sphi 0, %s118
      %s121 = sphi 0, %s120
      %s135 = sphi 0, %s121
      %s143 = sphi 0, %s145
      %s146 = sphi 0, %s143
      %s147 = sphi 0, %s146
      %s163 = sphi 0, %s147
    $region4: #{tpu_custom_call.1} parent=1 // loop_header_branch
      %22 = sbr.rel (%p20) target = $region8
    $region5: #{tpu_custom_call.1} parent=1 // loop_body
      %s24 = ssub.s32 %s19, 1
      %s25 = ssub.s32 %s19, 2
      %s32 = sadd.s32 1, %s27
      %p33 = scmp.ge.s32.totalorder %s32, 1
      %s34 = scalar_select %p33, 0, %s32
      %s35 = sadd.s32 1, %s26
      %s36 = scalar_select %p33, %s35, %s26
      %p37 = scmp.ge.s32.totalorder %s36, 2
      %s38 = scalar_select %p37, 0, %s36
      %s39 = ssub.s32 %s26, %s38
      %s40 = ssub.s32 %s27, %s34
      %s41 = sor.u32 %s39, %s40
      %p42 = scmp.eq.s32.totalorder %s41, 0
      %s44 = sadd.s32 %s43, 1
      %s45 = scalar_select %p42, %s43, %s44
      %p48 = pneg %p42
      %p49 = scmp.eq.s32.totalorder %s19, 1
      %p50 = por %p48, %p49
      %p51 = scmp.ne.s32.totalorder %s43, %s46
      %p52 = scmp.eq.s32.totalorder %s19, 0
      %p53 = por %p51, %p52
      %p54 = scmp.ne.s32.totalorder %s43, %s46
      %p55 = scmp.eq.s32.totalorder %s24, 1
      %p56 = por %p54, %p55
      %p57 = scmp.ne.s32.totalorder %s46, %s47
      %p58 = scmp.eq.s32.totalorder %s24, 0
      %p59 = por %p57, %p58
      %p60 = scmp.ne.s32.totalorder %s46, %s47
      %p61 = scmp.eq.s32.totalorder %s25, 1
      %p62 = por %p60, %p61
      %p64 = scmp.ne.s32.totalorder %s47, %s63
      %p65 = scmp.eq.s32.totalorder %s25, 0
      %p66 = por %p64, %p65
      %s67 = sadd.s32 %s27, 1
      %s68 = sadd.s32 %s34, 1
      %s69 = ssub.s32 %s26, %s38
      %s70 = ssub.s32 %s67, %s68
      %s71 = sor.u32 %s69, %s70
      %p72 = scmp.eq.s32.totalorder %s71, 0
      %s74 = sadd.s32 %s73, 1
      %s75 = scalar_select %p72, %s73, %s74
      %p78 = pneg %p72
      %p79 = scmp.eq.s32.totalorder %s19, 1
      %p80 = por %p78, %p79
      %p81 = scmp.ne.s32.totalorder %s73, %s76
      %p82 = scmp.eq.s32.totalorder %s19, 0
      %p83 = por %p81, %p82
      %p84 = scmp.ne.s32.totalorder %s73, %s76
      %p85 = scmp.eq.s32.totalorder %s24, 1
      %p86 = por %p84, %p85
      %p87 = scmp.ne.s32.totalorder %s76, %s77
      %p88 = scmp.eq.s32.totalorder %s24, 0
      %p89 = por %p87, %p88
      %p90 = scmp.ne.s32.totalorder %s76, %s77
      %p91 = scmp.eq.s32.totalorder %s25, 1
      %p92 = por %p90, %p91
      %p94 = scmp.ne.s32.totalorder %s77, %s93
      %p95 = scmp.eq.s32.totalorder %s25, 0
      %p96 = por %p94, %p95
      %s98 = sadd.s32 %s97, 1
      %p101 = scmp.eq.s32.totalorder %s19, 1
      %p102 = scmp.ne.s32.totalorder %s97, %s99
      %p103 = scmp.eq.s32.totalorder %s19, 0
      %p104 = por %p102, %p103
      %p105 = scmp.ne.s32.totalorder %s97, %s99
      %p106 = scmp.eq.s32.totalorder %s24, 1
      %p107 = por %p105, %p106
      %p108 = scmp.ne.s32.totalorder %s99, %s100
      %p109 = scmp.eq.s32.totalorder %s24, 0
      %p110 = por %p108, %p109
      %p111 = scmp.ne.s32.totalorder %s99, %s100
      %p112 = scmp.eq.s32.totalorder %s25, 1
      %p113 = por %p111, %p112
      %p115 = scmp.ne.s32.totalorder %s100, %s114
      %p116 = scmp.eq.s32.totalorder %s25, 0
      %p117 = por %p115, %p116
      %s119 = sadd.s32 %s118, 1
      %p122 = scmp.eq.s32.totalorder %s19, 1
      %p123 = scmp.ne.s32.totalorder %s118, %s120
      %p124 = scmp.eq.s32.totalorder %s19, 0
      %p125 = por %p123, %p124
      %p126 = scmp.ne.s32.totalorder %s118, %s120
      %p127 = scmp.eq.s32.totalorder %s24, 1
      %p128 = por %p126, %p127
      %p129 = scmp.ne.s32.totalorder %s120, %s121
      %p130 = scmp.eq.s32.totalorder %s24, 0
      %p131 = por %p129, %p130
      %p132 = scmp.ne.s32.totalorder %s120, %s121
      %p133 = scmp.eq.s32.totalorder %s25, 1
      %p134 = por %p132, %p133
      %p136 = scmp.ne.s32.totalorder %s121, %s135
      %p137 = scmp.eq.s32.totalorder %s25, 0
      %p138 = por %p136, %p137
      %s139 = ssub.s32 %s26, %s38
      %s140 = ssub.s32 %s27, %s34
      %s141 = sor.u32 %s139, %s140
      %p142 = scmp.eq.s32.totalorder %s141, 0
      %s144 = sadd.s32 %s143, 1
      %s145 = scalar_select %p142, %s143, %s144
      %p148 = pneg %p142
      %p149 = scmp.eq.s32.totalorder %s19, 1
      %p150 = por %p148, %p149
      %p151 = scmp.ne.s32.totalorder %s143, %s146
      %p152 = scmp.eq.s32.totalorder %s19, 0
      %p153 = por %p151, %p152
      %p154 = scmp.ne.s32.totalorder %s143, %s146
      %p155 = scmp.eq.s32.totalorder %s24, 1
      %p156 = por %p154, %p155
      %p157 = scmp.ne.s32.totalorder %s146, %s147
      %p158 = scmp.eq.s32.totalorder %s24, 0
      %p159 = por %p157, %p158
      %p160 = scmp.ne.s32.totalorder %s146, %s147
      %p161 = scmp.eq.s32.totalorder %s25, 1
      %p162 = por %p160, %p161
      %p164 = scmp.ne.s32.totalorder %s147, %s163
      %p165 = scmp.eq.s32.totalorder %s25, 0
      %p166 = por %p164, %p165
      %p167 = scmp.le.s32.totalorder 1, %s19
      %p168 = scmp.lt.s32.totalorder %s19, 3
      %p169 = pnand %p167, %p168
      %p170 = pneg %p169
      // Predicated region
      $region9: #{tpu_custom_call.1} parent=5 // pred_check
        _
      $region10: #{tpu_custom_call.1} parent=5 // pred_check_branch
        %172 = sbr.rel (%p169) target = $region12
      $region11: #{tpu_custom_call.1} parent=5 // pred_region
        %s173 = ssub.s32 %s19, 1
        // Predicated region
        $region13: #{tpu_custom_call.1} parent=11 // pred_check
          %p174 = pneg %p110
        $region14: #{tpu_custom_call.1} parent=11 // pred_check_branch
          %176 = sbr.rel (%p174) target = $region16
        $region15: #{tpu_custom_call.1} parent=11 // pred_region
          %s178 = ssub.s32 384, 384
          %179 = vsyncadd [#allocation6], %s178
          %s180 = sshll.u32 [#allocation7], 4
          %s181 = int_to_ptr.vmem [resolvable:$true] %s180
          %186 = dma.hbm_to_vmem [thread:$0]  %s2, 384, %s181, [#allocation6], 128, 128, 8
        $region16: #{tpu_custom_call.1} parent=11 // pred_fallthru
          _
        // Predicated region
        $region17: #{tpu_custom_call.1} parent=11 // pred_check
          %p187 = pneg %p131
        $region18: #{tpu_custom_call.1} parent=11 // pred_check_branch
          %189 = sbr.rel (%p187) target = $region20
        $region19: #{tpu_custom_call.1} parent=11 // pred_region
          _
        $region20: #{tpu_custom_call.1} parent=11 // pred_fallthru
          _
      $region12: #{tpu_custom_call.1} parent=5 // pred_fallthru
        _
      %p190 = scmp.lt.s32.totalorder %s19, 2
      // Predicated region
      $region21: #{tpu_custom_call.1} parent=5 // pred_check
        %p191 = pneg %p190
      $region22: #{tpu_custom_call.1} parent=5 // pred_check_branch
        %193 = sbr.rel (%p191) target = $region24
      $region23: #{tpu_custom_call.1} parent=5 // pred_region
        // Predicated region
        $region25: #{tpu_custom_call.1} parent=23 // pred_check
          %p194 = pneg %p53
        $region26: #{tpu_custom_call.1} parent=23 // pred_check_branch
          %196 = sbr.rel (%p194) target = $region28
        $region27: #{tpu_custom_call.1} parent=23 // pred_region
          %s197 = sand.u32 %s43, 1
          %s198 = scalar_lea.sflag [#allocation3], %s197
          %s199 = sand.u32 %s43, 1
          %s200 = smul.addr %s199, 8
          %s201 = scalar_lea.vmem [#allocation2], %s200
          %s203 = ssub.s32 128, 128
          %204 = vsyncadd %s198, %s203
          %s205 = smul.addr %s26, 2
          %s206 = sadd.s32 %s27, %s205
          %s207 = smul.addr %s206, 128
          %s208 = scalar_lea.hbm %s0, %s207
          %s210 = sshll.u32 %s201, 4
          %s211 = int_to_ptr.vmem [resolvable:$true] %s210
          %213 = dma.hbm_to_vmem [thread:$0]  %s208, 128, %s211, %s198
        $region28: #{tpu_custom_call.1} parent=23 // pred_fallthru
          _
        // Predicated region
        $region29: #{tpu_custom_call.1} parent=23 // pred_check
          %p214 = pneg %p83
        $region30: #{tpu_custom_call.1} parent=23 // pred_check_branch
          %216 = sbr.rel (%p214) target = $region32
        $region31: #{tpu_custom_call.1} parent=23 // pred_region
          %s217 = sand.u32 %s19, 1
          %s218 = scalar_lea.sflag [#allocation6], %s217
          %s219 = sand.u32 %s73, 1
          %s220 = smul.addr %s219, 8
          %s221 = scalar_lea.vmem [#allocation5], %s220
          %s222 = sadd.s32 %s27, 1
          %s224 = ssub.s32 128, 128
          %225 = vsyncadd %s218, %s224
          %s226 = smul.addr %s26, 2
          %s227 = sadd.s32 %s222, %s226
          %s228 = smul.addr %s227, 128
          %s229 = scalar_lea.hbm %s1, %s228
          %s231 = sshll.u32 %s221, 4
          %s232 = int_to_ptr.vmem [resolvable:$true] %s231
          %234 = dma.hbm_to_vmem [thread:$0]  %s229, 128, %s232, %s218
        $region32: #{tpu_custom_call.1} parent=23 // pred_fallthru
          _
      $region24: #{tpu_custom_call.1} parent=5 // pred_fallthru
        _
      %p235 = scmp.le.s32.totalorder 1, %s19
      %p236 = scmp.lt.s32.totalorder %s19, 3
      %p237 = pnand %p235, %p236
      %p238 = pneg %p237
      // Predicated region
      $region33: #{tpu_custom_call.1} parent=5 // pred_check
        _
      $region34: #{tpu_custom_call.1} parent=5 // pred_check_branch
        %240 = sbr.rel (%p237) target = $region36
      $region35: #{tpu_custom_call.1} parent=5 // pred_region
        %s241 = ssub.s32 %s19, 1
        %s242 = sand.u32 %s46, 1
        %s243 = scalar_lea.sflag [#allocation3], %s242
        %s244 = sand.u32 %s46, 1
        %s245 = smul.addr %s244, 8
        %s246 = scalar_lea.vmem [#allocation2], %s245
        // Predicated region
        $region37: #{tpu_custom_call.1} parent=35 // pred_check
          %p247 = pneg %p59
        $region38: #{tpu_custom_call.1} parent=35 // pred_check_branch
          %249 = sbr.rel (%p247) target = $region40
        $region39: #{tpu_custom_call.1} parent=35 // pred_region
          %250 = dma.done %s243, 128
        $region40: #{tpu_custom_call.1} parent=35 // pred_fallthru
          _
        %s251 = sand.u32 %s24, 1
        %s252 = scalar_lea.sflag [#allocation6], %s251
        %s253 = sand.u32 %s76, 1
        %s254 = smul.addr %s253, 8
        %s255 = scalar_lea.vmem [#allocation5], %s254
        // Predicated region
        $region41: #{tpu_custom_call.1} parent=35 // pred_check
          %p256 = pneg %p89
        $region42: #{tpu_custom_call.1} parent=35 // pred_check_branch
          %258 = sbr.rel (%p256) target = $region44
        $region43: #{tpu_custom_call.1} parent=35 // pred_region
          %259 = dma.done %s252, 128
        $region44: #{tpu_custom_call.1} parent=35 // pred_fallthru
          _
        // Predicated region
        $region45: #{tpu_custom_call.1} parent=35 // pred_check
          %p260 = pneg %p110
        $region46: #{tpu_custom_call.1} parent=35 // pred_check_branch
          %262 = sbr.rel (%p260) target = $region48
        $region47: #{tpu_custom_call.1} parent=35 // pred_region
          %263 = dma.done [#allocation6], 384
        $region48: #{tpu_custom_call.1} parent=35 // pred_fallthru
          _
        %s264 = sand.u32 %s46, 1
        %s265 = scalar_lea.sflag [#allocation3], %s264
        %s266 = sand.u32 %s46, 1
        %s267 = smul.addr %s266, 8
        %s268 = scalar_lea.vmem [#allocation2], %s267
        %p269 = pneg %p59
        %p270 = pneg %p56
        %s271 = sand.u32 %s24, 1
        %s272 = scalar_lea.sflag [#allocation6], %s271
        %s273 = sand.u32 %s76, 1
        %s274 = smul.addr %s273, 8
        %s275 = scalar_lea.vmem [#allocation5], %s274
        %p276 = pneg %p89
        %p277 = pneg %p86
        %p278 = pneg %p110
        %p279 = pneg %p107
        %p280 = pneg %p131
        %p281 = pneg %p128
        %p282 = pneg %p159
        %p283 = pneg %p156
        %s284 = sand.u32 %s146, 1
        %s285 = scalar_lea.sflag [#allocation4], %s284
        %s286 = sand.u32 %s146, 1
        %s287 = smul.addr %s286, 8
        %s288 = scalar_lea.vmem [#allocation8], %s287
        %s289 = sadd.s32 %s29, 1
        %v290 = vld [vmem:[%s246] sm:$0xff]
        %v291 = vld [vmem:[%s255] sm:$0xff]
        %v292 = vld [vmem:[#allocation7] sm:$0xff]
        %s293 = scalar_lea.vmem [#allocation7], 8
        %v294 = vld [vmem:[%s293] sm:$0xff]
        %297 = vrot.lane.b32.xlu0 %v290, 127
        %v298 = vpop.permute.xlu0 %297
        %299 = vrot.lane.b32.xlu0 %v291, 127
        %v300 = vpop.permute.xlu0 %299
        %vm301 = vcmask 1039360
        %v302 = vsel %vm301, %v298, %v300
        %vm304 = vcmask 64512
        %v306 = vsel %vm304, %v294, 0
        %308 = vmatprep.subr.mxu0 0.0
        %309 = vmatpush1.msra.mxu0 %v302
        %310 = vmatprep.subr.mxu0 0.0
        %311 = vmatpush1.msra.mxu0 0.0
        %312 = vmatprep.subr.mxu0 0.0
        %313 = vmatpush1.msra.mxu0 0.0
        %314 = vmatprep.subr.mxu0 0.0
        %315 = vmatpush1.msra.mxu0 0.0
        %316 = vmatprep.subr.mxu0 0.0
        %317 = vmatpush1.msra.mxu0 0.0
        %318 = vmatprep.subr.mxu0 0.0
        %319 = vmatpush1.msra.mxu0 0.0
        %320 = vmatprep.subr.mxu0 0.0
        %321 = vmatpush1.msra.mxu0 0.0
        %322 = vmatprep.subr.mxu0 0.0
        %323 = vmatpush1.msra.mxu0 0.0
        %324 = vmatprep.subr.mxu0 0.0
        %325 = vmatpush1.msra.mxu0 0.0
        %326 = vmatprep.subr.mxu0 0.0
        %327 = vmatpush1.msra.mxu0 0.0
        %328 = vmatprep.subr.mxu0 0.0
        %329 = vmatpush1.msra.mxu0 0.0
        %330 = vmatprep.subr.mxu0 0.0
        %331 = vmatpush1.msra.mxu0 0.0
        %332 = vmatprep.subr.mxu0 0.0
        %333 = vmatpush1.msra.mxu0 0.0
        %334 = vmatprep.subr.mxu0 0.0
        %335 = vmatpush1.msra.mxu0 0.0
        %336 = vmatprep.subr.mxu0 0.0
        %337 = vmatpush1.msra.mxu0 0.0
        %338 = vmatprep.subr.mxu0 0.0
        %339 = vmatpush1.msra.mxu0 0.0
        %340 = vmatprep.subr.mxu0 0.0
        %341 = vmatpush1.msra.mxu0 0.0
        %342 = vmatprep.subr.mxu0 0.0
        %343 = vmatpush1.msra.mxu0 0.0
        %344 = vmatprep.subr.mxu0 0.0
        %345 = vmatpush1.msra.mxu0 0.0
        %346 = vmatprep.subr.mxu0 0.0
        %347 = vmatpush1.msra.mxu0 0.0
        %348 = vmatprep.subr.mxu0 0.0
        %349 = vmatpush1.msra.mxu0 0.0
        %350 = vmatprep.subr.mxu0 0.0
        %351 = vmatpush1.msra.mxu0 0.0
        %352 = vmatprep.subr.mxu0 0.0
        %353 = vmatpush1.msra.mxu0 0.0
        %354 = vmatprep.subr.mxu0 0.0
        %355 = vmatpush1.msra.mxu0 0.0
        %356 = vmatprep.subr.mxu0 0.0
        %357 = vmatpush1.msra.mxu0 0.0
        %358 = vmatprep.subr.mxu0 0.0
        %359 = vmatpush1.msra.mxu0 0.0
        %360 = vmatprep.subr.mxu0 0.0
        %361 = vmatpush1.msra.mxu0 0.0
        %362 = vmatprep.subr.mxu0 0.0
        %363 = vmatpush1.msra.mxu0 0.0
        %364 = vmatprep.subr.mxu0 0.0
        %365 = vmatpush1.msra.mxu0 0.0
        %366 = vmatprep.subr.mxu0 0.0
        %367 = vmatpush1.msra.mxu0 0.0
        %368 = vmatprep.subr.mxu0 0.0
        %369 = vmatpush1.msra.mxu0 0.0
        %370 = vmatprep.subr.mxu0 0.0
        %371 = vmatpush1.msra.mxu0 0.0
        %372 = vmatprep.mubr.f32.mxu0 0.0
        %373 = vmatmul.mubr.f32.gmra.mrb[0].mxu0 %v306
        %v374 = vpop.f32.mrb[0].mxu0
        %v375 = vadd.f32 0.0, %v374
        %v376 = vpop.f32.mrb[0].mxu0
        %377 = vdwg.mxu0
        %v379 = vsel %vm304, %v292, 0
        %381 = vmatprep.subr.mxu0 0.0
        %382 = vmatpush1.msra.mxu0 %v290
        %383 = vmatprep.subr.mxu0 0.0
        %384 = vmatpush1.msra.mxu0 0.0
        %385 = vmatprep.subr.mxu0 0.0
        %386 = vmatpush1.msra.mxu0 0.0
        %387 = vmatprep.subr.mxu0 0.0
        %388 = vmatpush1.msra.mxu0 0.0
        %389 = vmatprep.subr.mxu0 0.0
        %390 = vmatpush1.msra.mxu0 0.0
        %391 = vmatprep.subr.mxu0 0.0
        %392 = vmatpush1.msra.mxu0 0.0
        %393 = vmatprep.subr.mxu0 0.0
        %394 = vmatpush1.msra.mxu0 0.0
        %395 = vmatprep.subr.mxu0 0.0
        %396 = vmatpush1.msra.mxu0 0.0
        %397 = vmatprep.subr.mxu0 0.0
        %398 = vmatpush1.msra.mxu0 0.0
        %399 = vmatprep.subr.mxu0 0.0
        %400 = vmatpush1.msra.mxu0 0.0
        %401 = vmatprep.subr.mxu0 0.0
        %402 = vmatpush1.msra.mxu0 0.0
        %403 = vmatprep.subr.mxu0 0.0
        %404 = vmatpush1.msra.mxu0 0.0
        %405 = vmatprep.subr.mxu0 0.0
        %406 = vmatpush1.msra.mxu0 0.0
        %407 = vmatprep.subr.mxu0 0.0
        %408 = vmatpush1.msra.mxu0 0.0
        %409 = vmatprep.subr.mxu0 0.0
        %410 = vmatpush1.msra.mxu0 0.0
        %411 = vmatprep.subr.mxu0 0.0
        %412 = vmatpush1.msra.mxu0 0.0
        %413 = vmatprep.subr.mxu0 0.0
        %414 = vmatpush1.msra.mxu0 0.0
        %415 = vmatprep.subr.mxu0 0.0
        %416 = vmatpush1.msra.mxu0 0.0
        %417 = vmatprep.subr.mxu0 0.0
        %418 = vmatpush1.msra.mxu0 0.0
        %419 = vmatprep.subr.mxu0 0.0
        %420 = vmatpush1.msra.mxu0 0.0
        %421 = vmatprep.subr.mxu0 0.0
        %422 = vmatpush1.msra.mxu0 0.0
        %423 = vmatprep.subr.mxu0 0.0
        %424 = vmatpush1.msra.mxu0 0.0
        %425 = vmatprep.subr.mxu0 0.0
        %426 = vmatpush1.msra.mxu0 0.0
        %427 = vmatprep.subr.mxu0 0.0
        %428 = vmatpush1.msra.mxu0 0.0
        %429 = vmatprep.subr.mxu0 0.0
        %430 = vmatpush1.msra.mxu0 0.0
        %431 = vmatprep.subr.mxu0 0.0
        %432 = vmatpush1.msra.mxu0 0.0
        %433 = vmatprep.subr.mxu0 0.0
        %434 = vmatpush1.msra.mxu0 0.0
        %435 = vmatprep.subr.mxu0 0.0
        %436 = vmatpush1.msra.mxu0 0.0
        %437 = vmatprep.subr.mxu0 0.0
        %438 = vmatpush1.msra.mxu0 0.0
        %439 = vmatprep.subr.mxu0 0.0
        %440 = vmatpush1.msra.mxu0 0.0
        %441 = vmatprep.subr.mxu0 0.0
        %442 = vmatpush1.msra.mxu0 0.0
        %443 = vmatprep.subr.mxu0 0.0
        %444 = vmatpush1.msra.mxu0 0.0
        %445 = vmatprep.mubr.f32.mxu0 0.0
        %446 = vmatmul.mubr.f32.gmra.mrb[0].mxu0 %v379
        %v447 = vpop.f32.mrb[0].mxu0
        %v448 = vadd.f32 %v375, %v447
        %v449 = vpop.f32.mrb[0].mxu0
        %450 = vdwg.mxu0
        %s451 = scalar_lea.vmem [#allocation7], 16
        %v452 = vld [vmem:[%s451] sm:$0xff]
        %453 = vrot.lane.b32.xlu0 %v290, 126
        %v454 = vpop.permute.xlu0 %453
        %455 = vrot.lane.b32.xlu0 %v291, 126
        %v456 = vpop.permute.xlu0 %455
        %vm457 = vcmask 1031168
        %v458 = vsel %vm457, %v454, %v456
        %v461 = vsel %vm304, %v452, 0
        %463 = vmatprep.subr.mxu0 0.0
        %464 = vmatpush1.msra.mxu0 %v458
        %465 = vmatprep.subr.mxu0 0.0
        %466 = vmatpush1.msra.mxu0 0.0
        %467 = vmatprep.subr.mxu0 0.0
        %468 = vmatpush1.msra.mxu0 0.0
        %469 = vmatprep.subr.mxu0 0.0
        %470 = vmatpush1.msra.mxu0 0.0
        %471 = vmatprep.subr.mxu0 0.0
        %472 = vmatpush1.msra.mxu0 0.0
        %473 = vmatprep.subr.mxu0 0.0
        %474 = vmatpush1.msra.mxu0 0.0
        %475 = vmatprep.subr.mxu0 0.0
        %476 = vmatpush1.msra.mxu0 0.0
        %477 = vmatprep.subr.mxu0 0.0
        %478 = vmatpush1.msra.mxu0 0.0
        %479 = vmatprep.subr.mxu0 0.0
        %480 = vmatpush1.msra.mxu0 0.0
        %481 = vmatprep.subr.mxu0 0.0
        %482 = vmatpush1.msra.mxu0 0.0
        %483 = vmatprep.subr.mxu0 0.0
        %484 = vmatpush1.msra.mxu0 0.0
        %485 = vmatprep.subr.mxu0 0.0
        %486 = vmatpush1.msra.mxu0 0.0
        %487 = vmatprep.subr.mxu0 0.0
        %488 = vmatpush1.msra.mxu0 0.0
        %489 = vmatprep.subr.mxu0 0.0
        %490 = vmatpush1.msra.mxu0 0.0
        %491 = vmatprep.subr.mxu0 0.0
        %492 = vmatpush1.msra.mxu0 0.0
        %493 = vmatprep.subr.mxu0 0.0
        %494 = vmatpush1.msra.mxu0 0.0
        %495 = vmatprep.subr.mxu0 0.0
        %496 = vmatpush1.msra.mxu0 0.0
        %497 = vmatprep.subr.mxu0 0.0
        %498 = vmatpush1.msra.mxu0 0.0
        %499 = vmatprep.subr.mxu0 0.0
        %500 = vmatpush1.msra.mxu0 0.0
        %501 = vmatprep.subr.mxu0 0.0
        %502 = vmatpush1.msra.mxu0 0.0
        %503 = vmatprep.subr.mxu0 0.0
        %504 = vmatpush1.msra.mxu0 0.0
        %505 = vmatprep.subr.mxu0 0.0
        %506 = vmatpush1.msra.mxu0 0.0
        %507 = vmatprep.subr.mxu0 0.0
        %508 = vmatpush1.msra.mxu0 0.0
        %509 = vmatprep.subr.mxu0 0.0
        %510 = vmatpush1.msra.mxu0 0.0
        %511 = vmatprep.subr.mxu0 0.0
        %512 = vmatpush1.msra.mxu0 0.0
        %513 = vmatprep.subr.mxu0 0.0
        %514 = vmatpush1.msra.mxu0 0.0
        %515 = vmatprep.subr.mxu0 0.0
        %516 = vmatpush1.msra.mxu0 0.0
        %517 = vmatprep.subr.mxu0 0.0
        %518 = vmatpush1.msra.mxu0 0.0
        %519 = vmatprep.subr.mxu0 0.0
        %520 = vmatpush1.msra.mxu0 0.0
        %521 = vmatprep.subr.mxu0 0.0
        %522 = vmatpush1.msra.mxu0 0.0
        %523 = vmatprep.subr.mxu0 0.0
        %524 = vmatpush1.msra.mxu0 0.0
        %525 = vmatprep.subr.mxu0 0.0
        %526 = vmatpush1.msra.mxu0 0.0
        %527 = vmatprep.mubr.f32.mxu0 0.0
        %528 = vmatmul.mubr.f32.gmra.mrb[0].mxu0 %v461
        %v529 = vpop.f32.mrb[0].mxu0
        %v530 = vadd.f32 0.0, %v529
        %v531 = vpop.f32.mrb[0].mxu0
        %532 = vdwg.mxu0
        %v533 = vadd.f32 %v448, %v530
        %v534 = vld [vmem:[%s3] sm:$0xff]
        %536 = vset.pattern.permute.xlu0 0
        %537 = vperm.xlu0 %536, %v534
        %v538 = vpop.permute.xlu0 %537
        %v540 = vadd.f32 %v533, %v538
        %541 = vst [vmem:[%s288] sm:$0xff] %v540
        %s542 = sand.u32 %s146, 1
        %s543 = scalar_lea.sflag [#allocation4], %s542
        %s544 = sand.u32 %s146, 1
        %s545 = smul.addr %s544, 8
        %s546 = scalar_lea.vmem [#allocation8], %s545
        // Predicated region
        $region49: #{tpu_custom_call.1} parent=35 // pred_check
          %p547 = pneg %p156
        $region50: #{tpu_custom_call.1} parent=35 // pred_check_branch
          %549 = sbr.rel (%p547) target = $region52
        $region51: #{tpu_custom_call.1} parent=35 // pred_region
          %s551 = ssub.s32 128, 128
          %552 = vsyncadd %s543, %s551
          %s553 = sadd.s32 %s29, %s28
          %s554 = smul.addr %s553, 128
          %s555 = scalar_lea.hbm %s4, %s554
          %s557 = sshll.u32 %s546, 4
          %s558 = int_to_ptr.vmem [resolvable:$true] %s557
          %560 = dma.vmem_to_hbm [thread:$0]  %s558, 128, %s555, %s543
        $region52: #{tpu_custom_call.1} parent=35 // pred_fallthru
          _
      $region36: #{tpu_custom_call.1} parent=5 // pred_fallthru
        _
      %p561 = scmp.le.s32.totalorder 2, %s19
      // Predicated region
      $region53: #{tpu_custom_call.1} parent=5 // pred_check
        %p562 = pneg %p561
      $region54: #{tpu_custom_call.1} parent=5 // pred_check_branch
        %564 = sbr.rel (%p562) target = $region56
      $region55: #{tpu_custom_call.1} parent=5 // pred_region
        %s565 = ssub.s32 %s19, 2
        // Predicated region
        $region57: #{tpu_custom_call.1} parent=55 // pred_check
          %p566 = pneg %p162
        $region58: #{tpu_custom_call.1} parent=55 // pred_check_branch
          %568 = sbr.rel (%p566) target = $region60
        $region59: #{tpu_custom_call.1} parent=55 // pred_region
          %s569 = sand.u32 %s147, 1
          %s570 = scalar_lea.sflag [#allocation4], %s569
          %s571 = sand.u32 %s147, 1
          %s572 = smul.addr %s571, 8
          %s573 = scalar_lea.vmem [#allocation8], %s572
          %574 = dma.done %s570, 128
        $region60: #{tpu_custom_call.1} parent=55 // pred_fallthru
          _
      $region56: #{tpu_custom_call.1} parent=5 // pred_fallthru
        _
    $region6: #{tpu_custom_call.1} parent=1 // loop_footer
      %s23 = sadd.s32 1, %s19
    $region7: #{tpu_custom_call.1} parent=1 // loop_footer_branch
      %18 = sbr.rel target = $region3
    $region8: #{tpu_custom_call.1} parent=1 // loop_exit
      _
    %575 = vsyncpa [#allocation3], 1
    %s576 = scalar_lea.sflag [#allocation3], 1
    %577 = vsyncpa %s576, 1
    %578 = vsyncpa [#allocation6], 1
    %s579 = scalar_lea.sflag [#allocation6], 1
    %580 = vsyncpa %s579, 1
    %581 = vsyncpa [#allocation4], 1
    %s582 = scalar_lea.sflag [#allocation4], 1
    %583 = vsyncpa %s582, 1

</llo_original>
